<compile_context>
chip_gen: v7x
topology: tpu7x:2x2x1
jax: 0.10.0
libtpu: 0.0.40
codegen_flags: <defaults>
</compile_context>

<pallas_src>
import functools

import jax
import jax.numpy as jnp
from jax.experimental import pallas as pl
from jax.experimental.pallas import tpu as pltpu

_LANE = 128  # vreg lane width; padded output width for lane-dense stores


def _round_up(n, m):
    return ((n + m - 1) // m) * m


def _dqn_kernel(x_ref, w1_ref, b1_ref, w2_ref, b2_ref, w3_ref, b3_ref, out_ref):
    # One batch tile per grid step: three MXU matmuls + VPU bias-add / ReLU,
    # fully fused. Weights live in VMEM for the whole grid (constant index_map).
    x = x_ref[...]

    h1 = jnp.dot(x, w1_ref[...], preferred_element_type=jnp.float32) + b1_ref[...]
    h1 = jnp.maximum(h1, 0.0)

    h2 = jnp.dot(h1, w2_ref[...], preferred_element_type=jnp.float32) + b2_ref[...]
    h2 = jnp.maximum(h2, 0.0)

    # Lane-dense (128-wide) store; padded columns carry exact zeros.
    out_ref[...] = (
        jnp.dot(h2, w3_ref[...], preferred_element_type=jnp.float32) + b3_ref[...]
    )


@functools.partial(jax.jit, static_argnames=("tile_m",))
def dqn_forward(x, params, *, tile_m=256):
    """Pallas forward pass for the DQN MLP.

    x: [B, state_size] float32
    params: dict with w1 [state,32], b1 [1,32], w2 [32,32], b2 [1,32],
            w3 [32,action], b3 [1,action]   (weights already in [in, out] layout)
    returns: [B, action_size] float32
    """
    batch, state_size = x.shape
    hidden = params["w1"].shape[1]
    action_size = params["w3"].shape[1]
    assert action_size <= _LANE, "pad strategy assumes action_size <= 128"

    # --- lane-dense final layer: zero-pad w3/b3 to 128 output columns -------
    w3p = jnp.zeros((hidden, _LANE), jnp.float32).at[:, :action_size].set(params["w3"])
    b3p = jnp.zeros((1, _LANE), jnp.float32).at[:, :action_size].set(params["b3"])

    # --- batch tiling: multiple of 8 sublanes, capped at tile_m -------------
    tm = min(_round_up(tile_m, 8), max(8, _round_up(batch, 8)))
    b_padded = _round_up(batch, tm)
    if b_padded != batch:
        x = jnp.pad(x, ((0, b_padded - batch), (0, 0)))

    grid = (b_padded // tm,)

    def const_spec(shape):
        # Constant block index -> parameter stays VMEM-resident across grid steps.
        return pl.BlockSpec(shape, lambda i: (0, 0))

    out = pl.pallas_call(
        _dqn_kernel,
        out_shape=jax.ShapeDtypeStruct((b_padded, _LANE), jnp.float32),
        grid=grid,
        in_specs=[
            pl.BlockSpec((tm, state_size), lambda i: (i, 0)),  # x: streamed tiles
            const_spec((state_size, hidden)),                  # w1
            const_spec((1, hidden)),                           # b1
            const_spec((hidden, hidden)),                      # w2
            const_spec((1, hidden)),                           # b2
            const_spec((hidden, _LANE)),                       # w3 (lane-padded)
            const_spec((1, _LANE)),                            # b3 (lane-padded)
        ],
        out_specs=pl.BlockSpec((tm, _LANE), lambda i: (i, 0)),
        compiler_params=pltpu.CompilerParams(
            dimension_semantics=("parallel",),  # megacore batch split on v7x
        ),
    )(
        x,
        params["w1"], params["b1"],
        params["w2"], params["b2"],
        w3p, b3p,
    )

    # Drop padded batch rows and padded (exact-zero) output columns.
    return out[:batch, :action_size]


def init_dqn_params(key, state_size, action_size, hidden=32):
    """Deterministic init mimicking PyTorch nn.Linear defaults
    (uniform(-1/sqrt(fan_in), 1/sqrt(fan_in)) for both weight and bias).
    Weights are stored as [in, out] (transposed vs. PyTorch's [out, in])."""
    def linear(k, fan_in, fan_out):
        kw, kb = jax.random.split(k)
        bound = 1.0 / jnp.sqrt(jnp.float32(fan_in))
        w = jax.random.uniform(kw, (fan_in, fan_out), jnp.float32, -bound, bound)
        b = jax.random.uniform(kb, (1, fan_out), jnp.float32, -bound, bound)
        return w, b

    k1, k2, k3 = jax.random.split(key, 3)
    w1, b1 = linear(k1, state_size, hidden)
    w2, b2 = linear(k2, hidden, hidden)
    w3, b3 = linear(k3, hidden, action_size)
    return {"w1": w1, "b1": b1, "w2": w2, "b2": b2, "w3": w3, "b3": b3}


def _reference_forward(x, params):
    h1 = jnp.maximum(x @ params["w1"] + params["b1"], 0.0)
    h2 = jnp.maximum(h1 @ params["w2"] + params["b2"], 0.0)
    return h2 @ params["w3"] + params["b3"]


if __name__ == "__main__":
    key = jax.random.PRNGKey(0)
    k_params, k_x1, k_x2 = jax.random.split(key, 3)

    state_size = 16   # e.g. flattened state vector for the Houston obstacle env
    action_size = 4
    params = init_dqn_params(k_params, state_size, action_size)

    # Small acting-style batch (single grid step).
    x_small = jax.random.normal(k_x1, (8, state_size), dtype=jnp.float32)
    out_small = jax.block_until_ready(dqn_forward(x_small, params))
    ref_small = _reference_forward(x_small, params)
    assert out_small.shape == (8, action_size)
    assert jnp.allclose(out_small, ref_small, atol=1e-5, rtol=1e-5)

    # Non-multiple-of-tile batch with a small tile to exercise the batch grid
    # (grid > 1) and the batch-padding / row-slicing path.
    x_big = jax.random.normal(k_x2, (20, state_size), dtype=jnp.float32)
    out_big = jax.block_until_ready(dqn_forward(x_big, params, tile_m=8))
    ref_big = _reference_forward(x_big, params)
    assert out_big.shape == (20, action_size)
    assert jnp.allclose(out_big, ref_big, atol=1e-5, rtol=1e-5)

    print("KERNEL_OK")
</pallas_src>

<mosaic_0001>
module attributes {stable_mosaic.version = 11 : i64} {
  func.func @_dqn_kernel(%arg0: i32, %arg1: memref<8x16xf32, #tpu.memory_space<vmem>>, %arg2: memref<16x32xf32, #tpu.memory_space<vmem>>, %arg3: memref<1x32xf32, #tpu.memory_space<vmem>>, %arg4: memref<32x32xf32, #tpu.memory_space<vmem>>, %arg5: memref<1x32xf32, #tpu.memory_space<vmem>>, %arg6: memref<32x128xf32, #tpu.memory_space<vmem>>, %arg7: memref<1x128xf32, #tpu.memory_space<vmem>>, %arg8: memref<8x128xf32, #tpu.memory_space<vmem>>) attributes {dimension_semantics = [#tpu.dimension_semantics<parallel>], iteration_bounds = array<i64: 1>, scalar_prefetch = 0 : i64, scratch_operands = 0 : i64, tpu.core_type = #tpu.core_type<tc>, window_params = [{transform_indices = @transform_0, window_bounds = array<i64: 8, 16>}, {pipeline_mode = #tpu.pipeline_mode<synchronous>, transform_indices = @transform_1, window_bounds = array<i64: 16, 32>}, {pipeline_mode = #tpu.pipeline_mode<synchronous>, transform_indices = @transform_2, window_bounds = array<i64: 1, 32>}, {pipeline_mode = #tpu.pipeline_mode<synchronous>, transform_indices = @transform_3, window_bounds = array<i64: 32, 32>}, {pipeline_mode = #tpu.pipeline_mode<synchronous>, transform_indices = @transform_4, window_bounds = array<i64: 1, 32>}, {pipeline_mode = #tpu.pipeline_mode<synchronous>, transform_indices = @transform_5, window_bounds = array<i64: 32, 128>}, {pipeline_mode = #tpu.pipeline_mode<synchronous>, transform_indices = @transform_6, window_bounds = array<i64: 1, 128>}, {transform_indices = @transform_7, window_bounds = array<i64: 8, 128>}]} {
    %c0 = arith.constant 0 : index
    %c0_0 = arith.constant 0 : index
    %0 = vector.load %arg1[%c0, %c0_0] : memref<8x16xf32, #tpu.memory_space<vmem>>, vector<8x16xf32>
    %c0_1 = arith.constant 0 : index
    %c0_2 = arith.constant 0 : index
    %1 = vector.load %arg2[%c0_1, %c0_2] : memref<16x32xf32, #tpu.memory_space<vmem>>, vector<16x32xf32>
    %cst = arith.constant dense<0.000000e+00> : vector<8x32xf32>
    %2 = tpu.matmul %0, %1, %cst {dimension_numbers = #tpu.dot_dimension_numbers<[1], [0], [0], [1], [0, 0, 1, 1], [], []>} : vector<8x16xf32>, vector<16x32xf32>, vector<8x32xf32> -> vector<8x32xf32>
    %c0_3 = arith.constant 0 : index
    %c0_4 = arith.constant 0 : index
    %3 = vector.load %arg3[%c0_3, %c0_4] : memref<1x32xf32, #tpu.memory_space<vmem>>, vector<1x32xf32>
    %4 = vector.broadcast %3 : vector<1x32xf32> to vector<8x32xf32>
    %5 = arith.addf %2, %4 : vector<8x32xf32>
    %cst_5 = arith.constant 0.000000e+00 : f32
    %6 = vector.broadcast %cst_5 : f32 to vector<8x32xf32>
    %7 = arith.maximumf %5, %6 : vector<8x32xf32>
    %c0_6 = arith.constant 0 : index
    %c0_7 = arith.constant 0 : index
    %8 = vector.load %arg4[%c0_6, %c0_7] : memref<32x32xf32, #tpu.memory_space<vmem>>, vector<32x32xf32>
    %cst_8 = arith.constant dense<0.000000e+00> : vector<8x32xf32>
    %9 = tpu.matmul %7, %8, %cst_8 {dimension_numbers = #tpu.dot_dimension_numbers<[1], [0], [0], [1], [0, 0, 1, 1], [], []>} : vector<8x32xf32>, vector<32x32xf32>, vector<8x32xf32> -> vector<8x32xf32>
    %c0_9 = arith.constant 0 : index
    %c0_10 = arith.constant 0 : index
    %10 = vector.load %arg5[%c0_9, %c0_10] : memref<1x32xf32, #tpu.memory_space<vmem>>, vector<1x32xf32>
    %11 = vector.broadcast %10 : vector<1x32xf32> to vector<8x32xf32>
    %12 = arith.addf %9, %11 : vector<8x32xf32>
    %cst_11 = arith.constant 0.000000e+00 : f32
    %13 = vector.broadcast %cst_11 : f32 to vector<8x32xf32>
    %14 = arith.maximumf %12, %13 : vector<8x32xf32>
    %c0_12 = arith.constant 0 : index
    %c0_13 = arith.constant 0 : index
    %15 = vector.load %arg6[%c0_12, %c0_13] : memref<32x128xf32, #tpu.memory_space<vmem>>, vector<32x128xf32>
    %cst_14 = arith.constant dense<0.000000e+00> : vector<8x128xf32>
    %16 = tpu.matmul %14, %15, %cst_14 {dimension_numbers = #tpu.dot_dimension_numbers<[1], [0], [0], [1], [0, 0, 1, 1], [], []>} : vector<8x32xf32>, vector<32x128xf32>, vector<8x128xf32> -> vector<8x128xf32>
    %c0_15 = arith.constant 0 : index
    %c0_16 = arith.constant 0 : index
    %17 = vector.load %arg7[%c0_15, %c0_16] : memref<1x128xf32, #tpu.memory_space<vmem>>, vector<1x128xf32>
    %18 = vector.broadcast %17 : vector<1x128xf32> to vector<8x128xf32>
    %19 = arith.addf %16, %18 : vector<8x128xf32>
    %c0_17 = arith.constant 0 : index
    %c0_18 = arith.constant 0 : index
    %20 = vector.load %arg8[%c0_17, %c0_18] : memref<8x128xf32, #tpu.memory_space<vmem>>, vector<8x128xf32>
    tpu.vector_store %arg8[%c0_17, %c0_18], %19 {strides = array<i32>} : memref<8x128xf32, #tpu.memory_space<vmem>>, vector<8x128xf32>,
    return
  }
  func.func @transform_0(%arg0: i32) -> (i32, i32) {
    %c0_i32 = arith.constant 0 : i32
    %c0_i32_0 = arith.constant 0 : i32
    return %arg0, %c0_i32 : i32, i32
  }
  func.func @transform_1(%arg0: i32) -> (i32, i32) {
    %c0_i32 = arith.constant 0 : i32
    %c0_i32_0 = arith.constant 0 : i32
    %c0_i32_1 = arith.constant 0 : i32
    return %c0_i32, %c0_i32_0 : i32, i32
  }
  func.func @transform_2(%arg0: i32) -> (i32, i32) {
    %c0_i32 = arith.constant 0 : i32
    %c0_i32_0 = arith.constant 0 : i32
    %c0_i32_1 = arith.constant 0 : i32
    return %c0_i32, %c0_i32_0 : i32, i32
  }
  func.func @transform_3(%arg0: i32) -> (i32, i32) {
    %c0_i32 = arith.constant 0 : i32
    %c0_i32_0 = arith.constant 0 : i32
    %c0_i32_1 = arith.constant 0 : i32
    return %c0_i32, %c0_i32_0 : i32, i32
  }
  func.func @transform_4(%arg0: i32) -> (i32, i32) {
    %c0_i32 = arith.constant 0 : i32
    %c0_i32_0 = arith.constant 0 : i32
    %c0_i32_1 = arith.constant 0 : i32
    return %c0_i32, %c0_i32_0 : i32, i32
  }
  func.func @transform_5(%arg0: i32) -> (i32, i32) {
    %c0_i32 = arith.constant 0 : i32
    %c0_i32_0 = arith.constant 0 : i32
    %c0_i32_1 = arith.constant 0 : i32
    return %c0_i32, %c0_i32_0 : i32, i32
  }
  func.func @transform_6(%arg0: i32) -> (i32, i32) {
    %c0_i32 = arith.constant 0 : i32
    %c0_i32_0 = arith.constant 0 : i32
    %c0_i32_1 = arith.constant 0 : i32
    return %c0_i32, %c0_i32_0 : i32, i32
  }
  func.func @transform_7(%arg0: i32) -> (i32, i32) {
    %c0_i32 = arith.constant 0 : i32
    %c0_i32_0 = arith.constant 0 : i32
    return %arg0, %c0_i32 : i32, i32
  }
}

</mosaic_0001>

<llo_original>
// kernel: dqn_forward.1
$region0: #{dqn_forward.1}
  #allocation0 [shape = 'u32[]', space=smem, size = 0x4, offset = 0x4, fixed_abs, tag = 'smem constant byte address 0x4 - core index']
  #allocation1 [shape = 'u32[144,128]{1,0:T(1,128)}', space=vmem, size = 0x12000, scoped, tag = 'internal scratch']
  %s0 = inlined_call_operand.vmem [shape: f32[8,16], index: 0, kind: input, shape index: {}]
  %s1 = inlined_call_operand.vmem [shape: f32[16,32], index: 1, kind: input, shape index: {}]
  %s2 = inlined_call_operand.vmem [shape: f32[1,32], index: 2, kind: input, shape index: {}]
  %s3 = inlined_call_operand.vmem [shape: f32[32,32], index: 3, kind: input, shape index: {}]
  %s4 = inlined_call_operand.vmem [shape: f32[1,32], index: 4, kind: input, shape index: {}]
  %s5 = inlined_call_operand.vmem [shape: f32[32,128], index: 5, kind: input, shape index: {}]
  %s6 = inlined_call_operand.vmem [shape: f32[1,128], index: 6, kind: input, shape index: {}]
  %s7 = inlined_call_operand.vmem [shape: f32[8,128], index: 7, kind: output, shape index: {}]
  %s8 = sld [smem:[#allocation0]]
  $region38: #{dqn_forward.1} parent=0
    _
  %s10 = ssub.s32 1, %s8
  %s11 = scalar_select 0, %s10, %s8
  // Predicated region
  $region2: #{dqn_forward.1} parent=0 // pred_check
    _
  $region3: #{dqn_forward.1} parent=0 // pred_check_branch
    %13 = sbr.rel (0) target = $region5
  $region4: #{dqn_forward.1} parent=0 // pred_region
    _
  $region5: #{dqn_forward.1} parent=0 // pred_fallthru
    _
  // Predicated region
  $region6: #{dqn_forward.1} parent=0 // pred_check
    _
  $region7: #{dqn_forward.1} parent=0 // pred_check_branch
    %15 = sbr.rel (0) target = $region9
  $region8: #{dqn_forward.1} parent=0 // pred_region
    _
  $region9: #{dqn_forward.1} parent=0 // pred_fallthru
    _
  // Predicated region
  $region10: #{dqn_forward.1} parent=0 // pred_check
    _
  $region11: #{dqn_forward.1} parent=0 // pred_check_branch
    %17 = sbr.rel (0) target = $region13
  $region12: #{dqn_forward.1} parent=0 // pred_region
    _
  $region13: #{dqn_forward.1} parent=0 // pred_fallthru
    _
  // Predicated region
  $region14: #{dqn_forward.1} parent=0 // pred_check
    _
  $region15: #{dqn_forward.1} parent=0 // pred_check_branch
    %19 = sbr.rel (0) target = $region17
  $region16: #{dqn_forward.1} parent=0 // pred_region
    _
  $region17: #{dqn_forward.1} parent=0 // pred_fallthru
    _
  // Predicated region
  $region18: #{dqn_forward.1} parent=0 // pred_check
    _
  $region19: #{dqn_forward.1} parent=0 // pred_check_branch
    %21 = sbr.rel (0) target = $region21
  $region20: #{dqn_forward.1} parent=0 // pred_region
    _
  $region21: #{dqn_forward.1} parent=0 // pred_fallthru
    _
  // Predicated region
  $region22: #{dqn_forward.1} parent=0 // pred_check
    _
  $region23: #{dqn_forward.1} parent=0 // pred_check_branch
    %23 = sbr.rel (0) target = $region25
  $region24: #{dqn_forward.1} parent=0 // pred_region
    _
  $region25: #{dqn_forward.1} parent=0 // pred_fallthru
    _
  // Predicated region
  $region26: #{dqn_forward.1} parent=0 // pred_check
    _
  $region27: #{dqn_forward.1} parent=0 // pred_check_branch
    %25 = sbr.rel (0) target = $region29
  $region28: #{dqn_forward.1} parent=0 // pred_region
    _
  $region29: #{dqn_forward.1} parent=0 // pred_fallthru
    _
  %v26 = vld [vmem:[%s0] sm:$0xff]
  %v27 = vld [vmem:[%s1] sm:$0xff]
  %v28 = vld [vmem:[%s1 + $0x8] sm:$0xff]
  %v29 = vld [vmem:[%s2] sm:$0x1]
  %v31 = vlaneseq
  %v32 = vshrl.u32 %v31, 7
  %v33 = vsub.s32 0, %v32
  %v34 = vrot.slane %v29, %v33
  %vm36 = vcmask 130048
  %v38 = vsel %vm36, %v26, 0
  %40 = vmatprep.subr.mxu0 0.0
  %41 = vmatpush1.msra.mxu0 %v27
  %42 = vmatprep.subr.mxu0 0.0
  %43 = vmatpush1.msra.mxu0 %v28
  %44 = vmatprep.subr.mxu0 0.0
  %45 = vmatpush1.msra.mxu0 0.0
  %46 = vmatprep.subr.mxu0 0.0
  %47 = vmatpush1.msra.mxu0 0.0
  %48 = vmatprep.subr.mxu0 0.0
  %49 = vmatpush1.msra.mxu0 0.0
  %50 = vmatprep.subr.mxu0 0.0
  %51 = vmatpush1.msra.mxu0 0.0
  %52 = vmatprep.subr.mxu0 0.0
  %53 = vmatpush1.msra.mxu0 0.0
  %54 = vmatprep.subr.mxu0 0.0
  %55 = vmatpush1.msra.mxu0 0.0
  %56 = vmatprep.subr.mxu0 0.0
  %57 = vmatpush1.msra.mxu0 0.0
  %58 = vmatprep.subr.mxu0 0.0
  %59 = vmatpush1.msra.mxu0 0.0
  %60 = vmatprep.subr.mxu0 0.0
  %61 = vmatpush1.msra.mxu0 0.0
  %62 = vmatprep.subr.mxu0 0.0
  %63 = vmatpush1.msra.mxu0 0.0
  %64 = vmatprep.subr.mxu0 0.0
  %65 = vmatpush1.msra.mxu0 0.0
  %66 = vmatprep.subr.mxu0 0.0
  %67 = vmatpush1.msra.mxu0 0.0
  %68 = vmatprep.subr.mxu0 0.0
  %69 = vmatpush1.msra.mxu0 0.0
  %70 = vmatprep.subr.mxu0 0.0
  %71 = vmatpush1.msra.mxu0 0.0
  %72 = vmatprep.subr.mxu0 0.0
  %73 = vmatpush1.msra.mxu0 0.0
  %74 = vmatprep.subr.mxu0 0.0
  %75 = vmatpush1.msra.mxu0 0.0
  %76 = vmatprep.subr.mxu0 0.0
  %77 = vmatpush1.msra.mxu0 0.0
  %78 = vmatprep.subr.mxu0 0.0
  %79 = vmatpush1.msra.mxu0 0.0
  %80 = vmatprep.subr.mxu0 0.0
  %81 = vmatpush1.msra.mxu0 0.0
  %82 = vmatprep.subr.mxu0 0.0
  %83 = vmatpush1.msra.mxu0 0.0
  %84 = vmatprep.subr.mxu0 0.0
  %85 = vmatpush1.msra.mxu0 0.0
  %86 = vmatprep.subr.mxu0 0.0
  %87 = vmatpush1.msra.mxu0 0.0
  %88 = vmatprep.subr.mxu0 0.0
  %89 = vmatpush1.msra.mxu0 0.0
  %90 = vmatprep.subr.mxu0 0.0
  %91 = vmatpush1.msra.mxu0 0.0
  %92 = vmatprep.subr.mxu0 0.0
  %93 = vmatpush1.msra.mxu0 0.0
  %94 = vmatprep.subr.mxu0 0.0
  %95 = vmatpush1.msra.mxu0 0.0
  %96 = vmatprep.subr.mxu0 0.0
  %97 = vmatpush1.msra.mxu0 0.0
  %98 = vmatprep.subr.mxu0 0.0
  %99 = vmatpush1.msra.mxu0 0.0
  %100 = vmatprep.subr.mxu0 0.0
  %101 = vmatpush1.msra.mxu0 0.0
  %102 = vmatprep.subr.mxu0 0.0
  %103 = vmatpush1.msra.mxu0 0.0
  %104 = vmatprep.mubr.f32.mxu0 0.0
  %105 = vmatmul.mubr.f32.gmra.mrb[0].mxu0 %v38
  %v106 = vpop.f32.mrb[0].mxu0
  %v107 = vadd.f32 %v34, %v106
  %v108 = vpop.f32.mrb[0].mxu0
  %109 = vdwg.mxu0
  %v110 = vmax.f32 %v107, 0.0
  %v111 = vld [vmem:[%s3] sm:$0xff]
  %v112 = vld [vmem:[%s3 + $0x8] sm:$0xff]
  %v113 = vld [vmem:[%s3 + $0x10] sm:$0xff]
  %v114 = vld [vmem:[%s3 + $0x18] sm:$0xff]
  %v115 = vld [vmem:[%s4] sm:$0x1]
  %v117 = vlaneseq
  %v118 = vshrl.u32 %v117, 7
  %v119 = vsub.s32 0, %v118
  %v120 = vrot.slane %v115, %v119
  %vm122 = vcmask 261120
  %v124 = vsel %vm122, %v110, 0
  %126 = vmatprep.subr.mxu0 0.0
  %127 = vmatpush1.msra.mxu0 %v111
  %128 = vmatprep.subr.mxu0 0.0
  %129 = vmatpush1.msra.mxu0 %v112
  %130 = vmatprep.subr.mxu0 0.0
  %131 = vmatpush1.msra.mxu0 %v113
  %132 = vmatprep.subr.mxu0 0.0
  %133 = vmatpush1.msra.mxu0 %v114
  %134 = vmatprep.subr.mxu0 0.0
  %135 = vmatpush1.msra.mxu0 0.0
  %136 = vmatprep.subr.mxu0 0.0
  %137 = vmatpush1.msra.mxu0 0.0
  %138 = vmatprep.subr.mxu0 0.0
  %139 = vmatpush1.msra.mxu0 0.0
  %140 = vmatprep.subr.mxu0 0.0
  %141 = vmatpush1.msra.mxu0 0.0
  %142 = vmatprep.subr.mxu0 0.0
  %143 = vmatpush1.msra.mxu0 0.0
  %144 = vmatprep.subr.mxu0 0.0
  %145 = vmatpush1.msra.mxu0 0.0
  %146 = vmatprep.subr.mxu0 0.0
  %147 = vmatpush1.msra.mxu0 0.0
  %148 = vmatprep.subr.mxu0 0.0
  %149 = vmatpush1.msra.mxu0 0.0
  %150 = vmatprep.subr.mxu0 0.0
  %151 = vmatpush1.msra.mxu0 0.0
  %152 = vmatprep.subr.mxu0 0.0
  %153 = vmatpush1.msra.mxu0 0.0
  %154 = vmatprep.subr.mxu0 0.0
  %155 = vmatpush1.msra.mxu0 0.0
  %156 = vmatprep.subr.mxu0 0.0
  %157 = vmatpush1.msra.mxu0 0.0
  %158 = vmatprep.subr.mxu0 0.0
  %159 = vmatpush1.msra.mxu0 0.0
  %160 = vmatprep.subr.mxu0 0.0
  %161 = vmatpush1.msra.mxu0 0.0
  %162 = vmatprep.subr.mxu0 0.0
  %163 = vmatpush1.msra.mxu0 0.0
  %164 = vmatprep.subr.mxu0 0.0
  %165 = vmatpush1.msra.mxu0 0.0
  %166 = vmatprep.subr.mxu0 0.0
  %167 = vmatpush1.msra.mxu0 0.0
  %168 = vmatprep.subr.mxu0 0.0
  %169 = vmatpush1.msra.mxu0 0.0
  %170 = vmatprep.subr.mxu0 0.0
  %171 = vmatpush1.msra.mxu0 0.0
  %172 = vmatprep.subr.mxu0 0.0
  %173 = vmatpush1.msra.mxu0 0.0
  %174 = vmatprep.subr.mxu0 0.0
  %175 = vmatpush1.msra.mxu0 0.0
  %176 = vmatprep.subr.mxu0 0.0
  %177 = vmatpush1.msra.mxu0 0.0
  %178 = vmatprep.subr.mxu0 0.0
  %179 = vmatpush1.msra.mxu0 0.0
  %180 = vmatprep.subr.mxu0 0.0
  %181 = vmatpush1.msra.mxu0 0.0
  %182 = vmatprep.subr.mxu0 0.0
  %183 = vmatpush1.msra.mxu0 0.0
  %184 = vmatprep.subr.mxu0 0.0
  %185 = vmatpush1.msra.mxu0 0.0
  %186 = vmatprep.subr.mxu0 0.0
  %187 = vmatpush1.msra.mxu0 0.0
  %188 = vmatprep.subr.mxu0 0.0
  %189 = vmatpush1.msra.mxu0 0.0
  %190 = vmatprep.mubr.f32.mxu0 0.0
  %191 = vmatmul.mubr.f32.gmra.mrb[0].mxu0 %v124
  %v192 = vpop.f32.mrb[0].mxu0
  %v193 = vadd.f32 %v120, %v192
  %v194 = vpop.f32.mrb[0].mxu0
  %195 = vdwg.mxu0
  %v196 = vmax.f32 %v193, 0.0
  %v197 = vld [vmem:[%s5] sm:$0xff]
  %v198 = vld [vmem:[%s5 + $0x8] sm:$0xff]
  %v199 = vld [vmem:[%s5 + $0x10] sm:$0xff]
  %v200 = vld [vmem:[%s5 + $0x18] sm:$0xff]
  %v201 = vld [vmem:[%s6] sm:$0x1]
  %v203 = vlaneseq
  %v204 = vshrl.u32 %v203, 7
  %v205 = vsub.s32 0, %v204
  %v206 = vrot.slane %v201, %v205
  %v209 = vsel %vm122, %v196, 0
  %211 = vmatprep.subr.mxu0 0.0
  %212 = vmatpush1.msra.mxu0 %v197
  %213 = vmatprep.subr.mxu0 0.0
  %214 = vmatpush1.msra.mxu0 %v198
  %215 = vmatprep.subr.mxu0 0.0
  %216 = vmatpush1.msra.mxu0 %v199
  %217 = vmatprep.subr.mxu0 0.0
  %218 = vmatpush1.msra.mxu0 %v200
  %219 = vmatprep.subr.mxu0 0.0
  %220 = vmatpush1.msra.mxu0 0.0
  %221 = vmatprep.subr.mxu0 0.0
  %222 = vmatpush1.msra.mxu0 0.0
  %223 = vmatprep.subr.mxu0 0.0
  %224 = vmatpush1.msra.mxu0 0.0
  %225 = vmatprep.subr.mxu0 0.0
  %226 = vmatpush1.msra.mxu0 0.0
  %227 = vmatprep.subr.mxu0 0.0
  %228 = vmatpush1.msra.mxu0 0.0
  %229 = vmatprep.subr.mxu0 0.0
  %230 = vmatpush1.msra.mxu0 0.0
  %231 = vmatprep.subr.mxu0 0.0
  %232 = vmatpush1.msra.mxu0 0.0
  %233 = vmatprep.subr.mxu0 0.0
  %234 = vmatpush1.msra.mxu0 0.0
  %235 = vmatprep.subr.mxu0 0.0
  %236 = vmatpush1.msra.mxu0 0.0
  %237 = vmatprep.subr.mxu0 0.0
  %238 = vmatpush1.msra.mxu0 0.0
  %239 = vmatprep.subr.mxu0 0.0
  %240 = vmatpush1.msra.mxu0 0.0
  %241 = vmatprep.subr.mxu0 0.0
  %242 = vmatpush1.msra.mxu0 0.0
  %243 = vmatprep.subr.mxu0 0.0
  %244 = vmatpush1.msra.mxu0 0.0
  %245 = vmatprep.subr.mxu0 0.0
  %246 = vmatpush1.msra.mxu0 0.0
  %247 = vmatprep.subr.mxu0 0.0
  %248 = vmatpush1.msra.mxu0 0.0
  %249 = vmatprep.subr.mxu0 0.0
  %250 = vmatpush1.msra.mxu0 0.0
  %251 = vmatprep.subr.mxu0 0.0
  %252 = vmatpush1.msra.mxu0 0.0
  %253 = vmatprep.subr.mxu0 0.0
  %254 = vmatpush1.msra.mxu0 0.0
  %255 = vmatprep.subr.mxu0 0.0
  %256 = vmatpush1.msra.mxu0 0.0
  %257 = vmatprep.subr.mxu0 0.0
  %258 = vmatpush1.msra.mxu0 0.0
  %259 = vmatprep.subr.mxu0 0.0
  %260 = vmatpush1.msra.mxu0 0.0
  %261 = vmatprep.subr.mxu0 0.0
  %262 = vmatpush1.msra.mxu0 0.0
  %263 = vmatprep.subr.mxu0 0.0
  %264 = vmatpush1.msra.mxu0 0.0
  %265 = vmatprep.subr.mxu0 0.0
  %266 = vmatpush1.msra.mxu0 0.0
  %267 = vmatprep.subr.mxu0 0.0
  %268 = vmatpush1.msra.mxu0 0.0
  %269 = vmatprep.subr.mxu0 0.0
  %270 = vmatpush1.msra.mxu0 0.0
  %271 = vmatprep.subr.mxu0 0.0
  %272 = vmatpush1.msra.mxu0 0.0
  %273 = vmatprep.subr.mxu0 0.0
  %274 = vmatpush1.msra.mxu0 0.0
  %275 = vmatprep.mubr.f32.mxu0 0.0
  %276 = vmatmul.mubr.f32.gmra.mrb[0].mxu0 %v209
  %v277 = vpop.f32.mrb[0].mxu0
  %v278 = vadd.f32 %v206, %v277
  %v279 = vpop.f32.mrb[0].mxu0
  %280 = vdwg.mxu0
  %281 = vst [vmem:[%s7] sm:$0xff] %v278
  // Predicated region
  $region30: #{dqn_forward.1} parent=0 // pred_check
    _
  $region31: #{dqn_forward.1} parent=0 // pred_check_branch
    %283 = sbr.rel (0) target = $region33
  $region32: #{dqn_forward.1} parent=0 // pred_region
    _
  $region33: #{dqn_forward.1} parent=0 // pred_fallthru
    _
  // Predicated region
  $region34: #{dqn_forward.1} parent=0 // pred_check
    _
  $region35: #{dqn_forward.1} parent=0 // pred_check_branch
    %285 = sbr.rel (0) target = $region37
  $region36: #{dqn_forward.1} parent=0 // pred_region
    _
  $region37: #{dqn_forward.1} parent=0 // pred_fallthru
    _

</llo_original>
